<compile_context>
chip_gen: v5e
topology: v5e:2x2
jax: 0.10.0
libtpu: 0.0.40
codegen_flags: <defaults>
</compile_context>

<pallas_src>
import functools

import jax
import jax.numpy as jnp
from jax.experimental import pallas as pl
from jax.experimental.pallas import tpu as pltpu

_LANE = 128


def _channel_attention_kernel(x_ref, w1_ref, w2_ref, o_ref,
                              sum_acc, max_acc,
                              *, inv_s, acc_w, lane_chunks,
                              last_valid, needs_mask):
    # x_ref  : (C, ts)     one batch row, one spatial lane-tile (batch squeezed)
    # w1_ref : (H, C)      fc1 weight (1x1x1 conv, bias=False)
    # w2_ref : (C, H)      fc2 weight (1x1x1 conv, bias=False)
    # o_ref  : (C, 1)      sigmoid gate for this batch row
    # sum_acc, max_acc : (C, acc_w) f32 per-lane running accumulators
    k = pl.program_id(1)
    n_k = pl.num_programs(1)

    @pl.when(k == 0)
    def _init():
        sum_acc[...] = jnp.zeros_like(sum_acc)
        max_acc[...] = jnp.full_like(max_acc, -jnp.inf)

    def accumulate(mask_tail):
        # Per-lane (VALU-only) accumulation over 128-wide chunks; the single
        # cross-lane XLU reduce happens once in the finalize block.
        for j in range(lane_chunks):
            lo = j * acc_w
            if mask_tail and lo >= last_valid:
                break                                   # fully out of bounds
            chunk = x_ref[:, lo:lo + acc_w].astype(jnp.float32)
            if mask_tail and lo + acc_w > last_valid:
                # Boundary chunk of the ragged last tile: static mask.
                lane = jax.lax.broadcasted_iota(jnp.int32, chunk.shape, 1)
                ok = lane < (last_valid - lo)
                cs = jnp.where(ok, chunk, 0.0)
                cm = jnp.where(ok, chunk, -jnp.inf)
            else:
                cs = chunk
                cm = chunk
            sum_acc[...] += cs
            max_acc[...] = jnp.maximum(max_acc[...], cm)

    if needs_mask:
        # Only the last spatial tile can be ragged; every other tile takes the
        # mask-free path (no iota / compare / selects).
        @pl.when(k == n_k - 1)
        def _ragged():
            accumulate(True)

        @pl.when(k < n_k - 1)
        def _full():
            accumulate(False)
    else:
        accumulate(False)

    @pl.when(k == n_k - 1)
    def _finalize():
        avg = jnp.sum(sum_acc[...], axis=-1, keepdims=True) * inv_s   # (C, 1)
        mx = jnp.max(max_acc[...], axis=-1, keepdims=True)            # (C, 1)
        # Fused MLP: one pair of matmuls serves both pooled vectors; weights
        # are used in their native orientation (no in-kernel transposes).
        v = jnp.concatenate([avg, mx], axis=-1)                       # (C, 2)
        h = jnp.dot(w1_ref[...].astype(jnp.float32), v,
                    preferred_element_type=jnp.float32)               # (H, 2)
        h = jnp.maximum(h, 0.0)                                       # ReLU
        y = jnp.dot(w2_ref[...].astype(jnp.float32), h,
                    preferred_element_type=jnp.float32)               # (C, 2)
        gate = jax.nn.sigmoid(y[:, 0:1] + y[:, 1:2])                  # (C, 1)
        o_ref[...] = gate.astype(o_ref.dtype)


def channel_attention(x, w1, w2, *, lane_tile=None,
                      target_block_bytes=4 * 1024 * 1024,
                      max_lane_chunks=64):
    """x: (B, C, *spatial) float32; w1: (Hid, C); w2: (C, Hid).
    Returns (B, C, 1, ..., 1), matching PyTorch ChannelAttention.forward."""
    B, C = x.shape[0], x.shape[1]
    spatial = x.shape[2:]
    S = 1
    for d in spatial:
        S *= d
    x_flat = x.reshape(B, C, S)
    itemsize = jnp.dtype(x_flat.dtype).itemsize

    # ---- lane-tile auto-sizing: ~target_block_bytes per x block, capped so
    #      the unrolled per-lane fold stays short, always a multiple of 128
    #      when streaming, whole-S full-extent block otherwise.
    c_rows = ((C + 7) // 8) * 8                       # sublane-padded rows
    if lane_tile is None:
        ts = target_block_bytes // (itemsize * c_rows)
    else:
        ts = int(lane_tile)
    ts = min(ts, max_lane_chunks * _LANE)
    ts = max(_LANE, (ts // _LANE) * _LANE)            # multiple of 128, >= 128
    if ts >= S:
        ts = S                                        # single full-extent tile
    n_k = int(pl.cdiv(S, ts))

    if n_k == 1:
        acc_w = ts
        lane_chunks = 1
        last_valid = ts
        needs_mask = False
    else:
        acc_w = _LANE
        lane_chunks = ts // _LANE
        last_valid = S - (n_k - 1) * ts               # valid lanes in last tile
        needs_mask = last_valid != ts

    kernel = functools.partial(
        _channel_attention_kernel,
        inv_s=float(1.0 / S), acc_w=acc_w, lane_chunks=lane_chunks,
        last_valid=last_valid, needs_mask=needs_mask)

    # No jnp.pad of x: ragged last tile is a Pallas partial edge block and the
    # in-kernel mask handles the overhang.  Bytes below are the true sizes.
    hid = w1.shape[0]
    cost = pl.CostEstimate(
        flops=int(2 * B * C * S + 8 * B * C * max(hid, 1)),
        transcendentals=int(B * C),
        bytes_accessed=int(x_flat.size * itemsize
                           + (w1.size + w2.size) * 4 + B * C * itemsize))

    x_block_bytes = c_rows * ts * itemsize
    scratch_bytes = 2 * c_rows * max(acc_w, _LANE) * 4
    w_bytes = 4 * (w1.size + w2.size) * 4
    vmem_need = 2 * x_block_bytes + scratch_bytes + w_bytes + (4 << 20)
    # <= 48 MiB keeps v7x (64 MiB physical VMEM) safe; v5e/v6e have 128 MiB.
    vmem_limit = int(min(max(vmem_need, 32 << 20), 48 << 20))

    out = pl.pallas_call(
        kernel,
        out_shape=jax.ShapeDtypeStruct((B, C, 1), x.dtype),
        grid_spec=pltpu.PrefetchScalarGridSpec(
            num_scalar_prefetch=0,
            # batch axis parallel (megacore on v7x); spatial reduction last.
            grid=(B, n_k),
            in_specs=[
                pl.BlockSpec((None, C, ts), lambda b, k: (b, 0, k)),
                pl.BlockSpec(w1.shape, lambda b, k: (0, 0)),
                pl.BlockSpec(w2.shape, lambda b, k: (0, 0)),
            ],
            out_specs=pl.BlockSpec((None, C, 1), lambda b, k: (b, 0, 0)),
            scratch_shapes=[
                pltpu.VMEM((C, acc_w), jnp.float32),   # per-lane running sum
                pltpu.VMEM((C, acc_w), jnp.float32),   # per-lane running max
            ]),
        compiler_params=pltpu.CompilerParams(
            dimension_semantics=("parallel", "arbitrary"),
            vmem_limit_bytes=vmem_limit),
        cost_estimate=cost,
    )(x_flat, w1, w2)

    # reshape back to NC1...1 like AdaptiveAvgPool3d(1) + 1x1x1 convs
    return out.reshape((B, C) + (1,) * len(spatial))


def reference(x, w1, w2):
    B, C = x.shape[0], x.shape[1]
    xf = x.reshape(B, C, -1)
    avg = xf.mean(axis=-1)
    mx = xf.max(axis=-1)

    def mlp(v):
        return jnp.maximum(v @ w1.T, 0.0) @ w2.T

    return jax.nn.sigmoid(mlp(avg) + mlp(mx)).reshape((B, C) + (1,) * (x.ndim - 2))


if __name__ == "__main__":
    key = jax.random.PRNGKey(0)
    kx, k1, k2, kx2, kx3, k3, k4 = jax.random.split(key, 7)

    # dim=3 (default): input is (B, C, D, H, W)
    B, C, D, H, W = 2, 4, 8, 8, 8
    # hidden_planes = C // 16 if C // 16 > 1 else C  -> C // 16 = 0, so hidden = C
    hidden = C // 16 if C // 16 > 1 else C

    x = jax.random.normal(kx, (B, C, D, H, W), dtype=jnp.float32)
    # Conv3d 1x1x1 weights (bias=False): shapes (hidden, C), (C, hidden)
    w1 = jax.random.normal(k1, (hidden, C), dtype=jnp.float32) * 0.1
    w2 = jax.random.normal(k2, (C, hidden), dtype=jnp.float32) * 0.1

    # 1) default path: auto tile collapses to a single full-extent tile (S=512)
    out = jax.block_until_ready(channel_attention(x, w1, w2))
    assert out.shape == (B, C, 1, 1, 1), out.shape
    assert jnp.allclose(out, reference(x, w1, w2), atol=1e-5, rtol=1e-5), "mismatch (default)"

    # 2) streamed path: 4 spatial tiles of 128 lanes (exercises accumulators)
    out_t = jax.block_until_ready(channel_attention(x, w1, w2, lane_tile=128))
    assert jnp.allclose(out_t, reference(x, w1, w2), atol=1e-5, rtol=1e-5), "mismatch (tiled)"

    # 3) streamed + ragged path: S = 5*7*9 = 315 not a multiple of 128, no pad
    x2 = jax.random.normal(kx2, (B, C, 5, 7, 9), dtype=jnp.float32)
    out_m = jax.block_until_ready(channel_attention(x2, w1, w2, lane_tile=128))
    assert out_m.shape == (B, C, 1, 1, 1), out_m.shape
    assert jnp.allclose(out_m, reference(x2, w1, w2), atol=1e-5, rtol=1e-5), "mismatch (ragged)"

    # 4) wider-C case with a real bottleneck (hidden = 32 // 16 = 2), ragged S
    C2 = 32
    hidden2 = C2 // 16 if C2 // 16 > 1 else C2
    x3 = jax.random.normal(kx3, (B, C2, 4, 8, 10), dtype=jnp.float32)   # S = 320
    w1b = jax.random.normal(k3, (hidden2, C2), dtype=jnp.float32) * 0.1
    w2b = jax.random.normal(k4, (C2, hidden2), dtype=jnp.float32) * 0.1
    out_w = jax.block_until_ready(channel_attention(x3, w1b, w2b, lane_tile=128))
    assert out_w.shape == (B, C2, 1, 1, 1), out_w.shape
    assert jnp.allclose(out_w, reference(x3, w1b, w2b), atol=1e-5, rtol=1e-5), "mismatch (wide)"

    print("KERNEL_OK")
</pallas_src>

<mosaic_0001>
module attributes {stable_mosaic.version = 11 : i64} {
  func.func @_channel_attention_kernel(%arg0: i32, %arg1: i32, %arg2: memref<1x4x512xf32, #tpu.memory_space<vmem>>, %arg3: memref<4x4xf32, #tpu.memory_space<vmem>>, %arg4: memref<4x4xf32, #tpu.memory_space<vmem>>, %arg5: memref<1x4x1xf32, #tpu.memory_space<vmem>>, %arg6: memref<4x512xf32, #tpu.memory_space<vmem>>, %arg7: memref<4x512xf32, #tpu.memory_space<vmem>>) attributes {dimension_semantics = [#tpu.dimension_semantics<parallel>, #tpu.dimension_semantics<arbitrary>], iteration_bounds = array<i64: 2, 1>, scalar_prefetch = 0 : i64, scratch_operands = 2 : i64, tpu.core_type = #tpu.core_type<tc>, window_params = [{transform_indices = @transform_0, window_bounds = array<i64: 1, 4, 512>}, {pipeline_mode = #tpu.pipeline_mode<synchronous>, transform_indices = @transform_1, window_bounds = array<i64: 4, 4>}, {pipeline_mode = #tpu.pipeline_mode<synchronous>, transform_indices = @transform_2, window_bounds = array<i64: 4, 4>}, {transform_indices = @transform_3, window_bounds = array<i64: 1, 4, 1>}]} {
    %c0_i32 = arith.constant 0 : i32
    %0 = arith.cmpi eq, %arg1, %c0_i32 : i32
    %1 = arith.extui %0 : i1 to i32
    %c0_i32_0 = arith.constant 0 : i32
    %2 = arith.cmpi ne, %1, %c0_i32_0 : i32
    scf.if %2 {
      %cst = arith.constant 0.000000e+00 : f32
      %14 = vector.broadcast %cst : f32 to vector<4x512xf32>
      %c0_13 = arith.constant 0 : index
      %c0_14 = arith.constant 0 : index
      %15 = vector.load %arg6[%c0_13, %c0_14] : memref<4x512xf32, #tpu.memory_space<vmem>>, vector<4x512xf32>
      tpu.vector_store %arg6[%c0_13, %c0_14], %14 {strides = array<i32>} : memref<4x512xf32, #tpu.memory_space<vmem>>, vector<4x512xf32>,
      %cst_15 = arith.constant 0xFF800000 : f32
      %16 = vector.broadcast %cst_15 : f32 to vector<4x512xf32>
      %c0_16 = arith.constant 0 : index
      %c0_17 = arith.constant 0 : index
      %17 = vector.load %arg7[%c0_16, %c0_17] : memref<4x512xf32, #tpu.memory_space<vmem>>, vector<4x512xf32>
      tpu.vector_store %arg7[%c0_16, %c0_17], %16 {strides = array<i32>} : memref<4x512xf32, #tpu.memory_space<vmem>>, vector<4x512xf32>,
    } else {
    }
    %c0 = arith.constant 0 : index
    %c0_1 = arith.constant 0 : index
    %c0_2 = arith.constant 0 : index
    %3 = vector.load %arg2[%c0, %c0_1, %c0_2] : memref<1x4x512xf32, #tpu.memory_space<vmem>>, vector<1x4x512xf32>
    %4 = vector.shape_cast %3 : vector<1x4x512xf32> to vector<4x512xf32>
    %c0_3 = arith.constant 0 : index
    %c0_4 = arith.constant 0 : index
    %5 = vector.load %arg6[%c0_3, %c0_4] : memref<4x512xf32, #tpu.memory_space<vmem>>, vector<4x512xf32>
    %6 = arith.addf %5, %4 : vector<4x512xf32>
    %c0_5 = arith.constant 0 : index
    %c0_6 = arith.constant 0 : index
    %7 = vector.load %arg6[%c0_5, %c0_6] : memref<4x512xf32, #tpu.memory_space<vmem>>, vector<4x512xf32>
    tpu.vector_store %arg6[%c0_5, %c0_6], %6 {strides = array<i32>} : memref<4x512xf32, #tpu.memory_space<vmem>>, vector<4x512xf32>,
    %c0_7 = arith.constant 0 : index
    %c0_8 = arith.constant 0 : index
    %8 = vector.load %arg7[%c0_7, %c0_8] : memref<4x512xf32, #tpu.memory_space<vmem>>, vector<4x512xf32>
    %9 = arith.maximumf %8, %4 : vector<4x512xf32>
    %c0_9 = arith.constant 0 : index
    %c0_10 = arith.constant 0 : index
    %10 = vector.load %arg7[%c0_9, %c0_10] : memref<4x512xf32, #tpu.memory_space<vmem>>, vector<4x512xf32>
    tpu.vector_store %arg7[%c0_9, %c0_10], %9 {strides = array<i32>} : memref<4x512xf32, #tpu.memory_space<vmem>>, vector<4x512xf32>,
    %c0_i32_11 = arith.constant 0 : i32
    %11 = arith.cmpi eq, %arg1, %c0_i32_11 : i32
    %12 = arith.extui %11 : i1 to i32
    %c0_i32_12 = arith.constant 0 : i32
    %13 = arith.cmpi ne, %12, %c0_i32_12 : i32
    scf.if %13 {
      %c0_13 = arith.constant 0 : index
      %c0_14 = arith.constant 0 : index
      %14 = vector.load %arg6[%c0_13, %c0_14] : memref<4x512xf32, #tpu.memory_space<vmem>>, vector<4x512xf32>
      %cst = arith.constant dense<0.000000e+00> : vector<4xf32>
      %15 = vector.multi_reduction <add>, %14, %cst [1] : vector<4x512xf32> to vector<4xf32>
      %16 = vector.shape_cast %15 : vector<4xf32> to vector<4x1xf32>
      %cst_15 = arith.constant 0.001953125 : f32
      %17 = vector.broadcast %cst_15 : f32 to vector<4x1xf32>
      %18 = arith.mulf %16, %17 : vector<4x1xf32>
      %c0_16 = arith.constant 0 : index
      %c0_17 = arith.constant 0 : index
      %19 = vector.load %arg7[%c0_16, %c0_17] : memref<4x512xf32, #tpu.memory_space<vmem>>, vector<4x512xf32>
      %cst_18 = arith.constant dense<0xFF800000> : vector<4xf32>
      %20 = vector.multi_reduction <maximumf>, %19, %cst_18 [1] : vector<4x512xf32> to vector<4xf32>
      %21 = vector.shape_cast %20 : vector<4xf32> to vector<4x1xf32>
      %22 = tpu.concatenate %18, %21 in 1 : vector<4x1xf32>, vector<4x1xf32> -> vector<4x2xf32>
      %c0_19 = arith.constant 0 : index
      %c0_20 = arith.constant 0 : index
      %23 = vector.load %arg3[%c0_19, %c0_20] : memref<4x4xf32, #tpu.memory_space<vmem>>, vector<4x4xf32>
      %cst_21 = arith.constant dense<0.000000e+00> : vector<4x2xf32>
      %24 = tpu.matmul %23, %22, %cst_21 {dimension_numbers = #tpu.dot_dimension_numbers<[1], [0], [0], [1], [0, 0, 1, 1], [], []>} : vector<4x4xf32>, vector<4x2xf32>, vector<4x2xf32> -> vector<4x2xf32>
      %cst_22 = arith.constant 0.000000e+00 : f32
      %25 = vector.broadcast %cst_22 : f32 to vector<4x2xf32>
      %26 = arith.maximumf %24, %25 : vector<4x2xf32>
      %c0_23 = arith.constant 0 : index
      %c0_24 = arith.constant 0 : index
      %27 = vector.load %arg4[%c0_23, %c0_24] : memref<4x4xf32, #tpu.memory_space<vmem>>, vector<4x4xf32>
      %cst_25 = arith.constant dense<0.000000e+00> : vector<4x2xf32>
      %28 = tpu.matmul %27, %26, %cst_25 {dimension_numbers = #tpu.dot_dimension_numbers<[1], [0], [0], [1], [0, 0, 1, 1], [], []>} : vector<4x4xf32>, vector<4x2xf32>, vector<4x2xf32> -> vector<4x2xf32>
      %29 = vector.extract_strided_slice %28 {offsets = [0, 0], sizes = [4, 1], strides = [1, 1]} : vector<4x2xf32> to vector<4x1xf32>
      %30 = vector.extract_strided_slice %28 {offsets = [0, 1], sizes = [4, 1], strides = [1, 1]} : vector<4x2xf32> to vector<4x1xf32>
      %31 = arith.addf %29, %30 : vector<4x1xf32>
      %32 = arith.negf %31 : vector<4x1xf32>
      %33 = math.exp %32 : vector<4x1xf32>
      %cst_26 = arith.constant 1.000000e+00 : f32
      %34 = vector.broadcast %cst_26 : f32 to vector<4x1xf32>
      %35 = arith.addf %34, %33 : vector<4x1xf32>
      %36 = arith.divf %34, %35 : vector<4x1xf32>
      %c0_27 = arith.constant 0 : index
      %c0_28 = arith.constant 0 : index
      %c0_29 = arith.constant 0 : index
      %37 = vector.load %arg5[%c0_27, %c0_28, %c0_29] : memref<1x4x1xf32, #tpu.memory_space<vmem>>, vector<1x4x1xf32>
      %38 = vector.shape_cast %37 : vector<1x4x1xf32> to vector<4x1xf32>
      %39 = vector.shape_cast %36 : vector<4x1xf32> to vector<1x4x1xf32>
      tpu.vector_store %arg5[%c0_27, %c0_28, %c0_29], %39 {strides = array<i32>} : memref<1x4x1xf32, #tpu.memory_space<vmem>>, vector<1x4x1xf32>,
    } else {
    }
    return
  }
  func.func @transform_0(%arg0: i32, %arg1: i32) -> (i32, i32, i32) {
    %c0_i32 = arith.constant 0 : i32
    %c0_i32_0 = arith.constant 0 : i32
    return %arg0, %c0_i32, %arg1 : i32, i32, i32
  }
  func.func @transform_1(%arg0: i32, %arg1: i32) -> (i32, i32) {
    %c0_i32 = arith.constant 0 : i32
    %c0_i32_0 = arith.constant 0 : i32
    %c0_i32_1 = arith.constant 0 : i32
    return %c0_i32, %c0_i32_0 : i32, i32
  }
  func.func @transform_2(%arg0: i32, %arg1: i32) -> (i32, i32) {
    %c0_i32 = arith.constant 0 : i32
    %c0_i32_0 = arith.constant 0 : i32
    %c0_i32_1 = arith.constant 0 : i32
    return %c0_i32, %c0_i32_0 : i32, i32
  }
  func.func @transform_3(%arg0: i32, %arg1: i32) -> (i32, i32, i32) {
    %c0_i32 = arith.constant 0 : i32
    %c0_i32_0 = arith.constant 0 : i32
    %c0_i32_1 = arith.constant 0 : i32
    return %arg0, %c0_i32, %c0_i32_0 : i32, i32, i32
  }
}

</mosaic_0001>

<llo_original>
// kernel: tpu_custom_call.1
$region0: #{tpu_custom_call.1}
  #allocation0 [shape = 'u32[]', space=smem, size = 0x4, offset = 0x4, fixed_abs, tag = 'smem constant byte address 0x4 - core index']
  #allocation1 [shape = 'u32[72,128]{1,0:T(1,128)}', space=vmem, size = 0x9000, scoped, tag = 'internal scratch']
  #allocation2 [shape = 'f32[4,512]{1,0:T(4,128)}', space=vmem, size = 0x2000, scoped, tag = 'scratch operand']
  #allocation3 [shape = 'f32[4,512]{1,0:T(4,128)}', space=vmem, size = 0x2000, scoped, tag = 'scratch operand']
  %s0 = inlined_call_operand.hbm [shape: f32[2,4,512], index: 0, kind: input, shape index: {}]
  %s1 = inlined_call_operand.hbm [shape: f32[4,4], index: 1, kind: input, shape index: {}]
  %s2 = inlined_call_operand.hbm [shape: f32[4,4], index: 2, kind: input, shape index: {}]
  %s3 = inlined_call_operand.vmem [shape: f32[2,4,1], index: 3, kind: output, shape index: {}]
  %s4 = sld [smem:[#allocation0]]
  $region65: #{tpu_custom_call.1} parent=0
    _
  %s6 = ssub.s32 1, %s4
  %s7 = scalar_select 0, %s6, %s4
  $region1: #{tpu_custom_call.1} parent=0
    #allocation4 [shape = 'u8[16384]{0}', space=vmem, size = 0x4000, scoped, tag = 'input window, operand 0']
    #allocation5 [shape = 's32[2]{0}', space=sflag, size = 0x8, scoped, tag = 'scoped memory for tpu_custom_call.1']
    #allocation6 [shape = 'u8[2048]{0}', space=vmem, size = 0x800, scoped, tag = 'input window, operand 1, single buffered']
    #allocation7 [shape = 's32[1]{0}', space=sflag, size = 0x4, scoped, tag = 'scoped memory for tpu_custom_call.1']
    #allocation8 [shape = 'u8[2048]{0}', space=vmem, size = 0x800, scoped, tag = 'input window, operand 2, single buffered']
    %8 = vsyncpa [#allocation5], 0
    %s9 = scalar_lea.sflag [#allocation5], 1
    %10 = vsyncpa %s9, 0
    %11 = vsyncpa [#allocation7], 0
    loop: start=0, step=1, limit=4
    $region2: #{tpu_custom_call.1} parent=1 // loop_pre_header
      _
    $region3: #{tpu_custom_call.1} parent=1 // loop_header
      %s13 = sphi 0, %s17
      %p14 = scmp.ge.s32.totalorder %s13, 4
      %s20 = sphi 0, %s32
      %s21 = sphi 0, %s28
      %s22 = sphi 0, %s20
      %s23 = sphi 0, %s21
      %s24 = sphi 0, %s22
      %s25 = sphi 0, %s23
      %s37 = sphi 0, %s39
      %s40 = sphi 0, %s37
      %s41 = sphi 0, %s40
      %s57 = sphi 0, %s41
      %s61 = sphi 0, %s61
      %s63 = sphi 0, %s61
      %s64 = sphi 0, %s63
      %s78 = sphi 0, %s64
      %s82 = sphi 0, %s82
      %s84 = sphi 0, %s82
      %s85 = sphi 0, %s84
      %s99 = sphi 0, %s85
      %s105 = sphi 0, %s107
      %s108 = sphi 0, %s105
      %s109 = sphi 0, %s108
      %s125 = sphi 0, %s109
    $region4: #{tpu_custom_call.1} parent=1 // loop_header_branch
      %16 = sbr.rel (%p14) target = $region8
    $region5: #{tpu_custom_call.1} parent=1 // loop_body
      %s18 = ssub.s32 %s13, 1
      %s19 = ssub.s32 %s13, 2
      %s26 = sadd.s32 1, %s21
      %p27 = scmp.ge.s32.totalorder %s26, 1
      %s28 = scalar_select %p27, 0, %s26
      %s29 = sadd.s32 1, %s20
      %s30 = scalar_select %p27, %s29, %s20
      %p31 = scmp.ge.s32.totalorder %s30, 2
      %s32 = scalar_select %p31, 0, %s30
      %s33 = ssub.s32 %s20, %s32
      %s34 = ssub.s32 %s21, %s28
      %s35 = sor.u32 %s33, %s34
      %p36 = scmp.eq.s32.totalorder %s35, 0
      %s38 = sadd.s32 %s37, 1
      %s39 = scalar_select %p36, %s37, %s38
      %p42 = pneg %p36
      %p43 = scmp.eq.s32.totalorder %s13, 1
      %p44 = por %p42, %p43
      %p45 = scmp.ne.s32.totalorder %s37, %s40
      %p46 = scmp.eq.s32.totalorder %s13, 0
      %p47 = por %p45, %p46
      %p48 = scmp.ne.s32.totalorder %s37, %s40
      %p49 = scmp.eq.s32.totalorder %s18, 1
      %p50 = por %p48, %p49
      %p51 = scmp.ne.s32.totalorder %s40, %s41
      %p52 = scmp.eq.s32.totalorder %s18, 0
      %p53 = por %p51, %p52
      %p54 = scmp.ne.s32.totalorder %s40, %s41
      %p55 = scmp.eq.s32.totalorder %s19, 1
      %p56 = por %p54, %p55
      %p58 = scmp.ne.s32.totalorder %s41, %s57
      %p59 = scmp.eq.s32.totalorder %s19, 0
      %p60 = por %p58, %p59
      %s62 = sadd.s32 %s61, 1
      %p65 = scmp.eq.s32.totalorder %s13, 1
      %p66 = scmp.ne.s32.totalorder %s61, %s63
      %p67 = scmp.eq.s32.totalorder %s13, 0
      %p68 = por %p66, %p67
      %p69 = scmp.ne.s32.totalorder %s61, %s63
      %p70 = scmp.eq.s32.totalorder %s18, 1
      %p71 = por %p69, %p70
      %p72 = scmp.ne.s32.totalorder %s63, %s64
      %p73 = scmp.eq.s32.totalorder %s18, 0
      %p74 = por %p72, %p73
      %p75 = scmp.ne.s32.totalorder %s63, %s64
      %p76 = scmp.eq.s32.totalorder %s19, 1
      %p77 = por %p75, %p76
      %p79 = scmp.ne.s32.totalorder %s64, %s78
      %p80 = scmp.eq.s32.totalorder %s19, 0
      %p81 = por %p79, %p80
      %s83 = sadd.s32 %s82, 1
      %p86 = scmp.eq.s32.totalorder %s13, 1
      %p87 = scmp.ne.s32.totalorder %s82, %s84
      %p88 = scmp.eq.s32.totalorder %s13, 0
      %p89 = por %p87, %p88
      %p90 = scmp.ne.s32.totalorder %s82, %s84
      %p91 = scmp.eq.s32.totalorder %s18, 1
      %p92 = por %p90, %p91
      %p93 = scmp.ne.s32.totalorder %s84, %s85
      %p94 = scmp.eq.s32.totalorder %s18, 0
      %p95 = por %p93, %p94
      %p96 = scmp.ne.s32.totalorder %s84, %s85
      %p97 = scmp.eq.s32.totalorder %s19, 1
      %p98 = por %p96, %p97
      %p100 = scmp.ne.s32.totalorder %s85, %s99
      %p101 = scmp.eq.s32.totalorder %s19, 0
      %p102 = por %p100, %p101
      %s103 = ssub.s32 %s20, %s32
      %p104 = scmp.eq.s32.totalorder %s103, 0
      %s106 = sadd.s32 %s105, 1
      %s107 = scalar_select %p104, %s105, %s106
      %p110 = pneg %p104
      %p111 = scmp.eq.s32.totalorder %s13, 1
      %p112 = por %p110, %p111
      %p113 = scmp.ne.s32.totalorder %s105, %s108
      %p114 = scmp.eq.s32.totalorder %s13, 0
      %p115 = por %p113, %p114
      %p116 = scmp.ne.s32.totalorder %s105, %s108
      %p117 = scmp.eq.s32.totalorder %s18, 1
      %p118 = por %p116, %p117
      %p119 = scmp.ne.s32.totalorder %s108, %s109
      %p120 = scmp.eq.s32.totalorder %s18, 0
      %p121 = por %p119, %p120
      %p122 = scmp.ne.s32.totalorder %s108, %s109
      %p123 = scmp.eq.s32.totalorder %s19, 1
      %p124 = por %p122, %p123
      %p126 = scmp.ne.s32.totalorder %s109, %s125
      %p127 = scmp.eq.s32.totalorder %s19, 0
      %p128 = por %p126, %p127
      %p129 = scmp.le.s32.totalorder 1, %s13
      %p130 = scmp.lt.s32.totalorder %s13, 3
      %p131 = pnand %p129, %p130
      %p132 = pneg %p131
      // Predicated region
      $region9: #{tpu_custom_call.1} parent=5 // pred_check
        _
      $region10: #{tpu_custom_call.1} parent=5 // pred_check_branch
        %134 = sbr.rel (%p131) target = $region12
      $region11: #{tpu_custom_call.1} parent=5 // pred_region
        %s135 = ssub.s32 %s13, 1
        // Predicated region
        $region13: #{tpu_custom_call.1} parent=11 // pred_check
          %p136 = pneg %p74
        $region14: #{tpu_custom_call.1} parent=11 // pred_check_branch
          %138 = sbr.rel (%p136) target = $region16
        $region15: #{tpu_custom_call.1} parent=11 // pred_region
          %140 = vsyncadd [#allocation7], 0
          %s142 = sshll.u32 %s1, 4
          %s143 = int_to_ptr.hbm [resolvable:$true] %s142
          %s144 = sshll.u32 [#allocation6], 4
          %s145 = int_to_ptr.vmem [resolvable:$true] %s144
          %147 = dma.hbm_to_vmem [thread:$0]  %s143, 64, %s145, [#allocation7]
        $region16: #{tpu_custom_call.1} parent=11 // pred_fallthru
          _
        // Predicated region
        $region17: #{tpu_custom_call.1} parent=11 // pred_check
          %p148 = pneg %p95
        $region18: #{tpu_custom_call.1} parent=11 // pred_check_branch
          %150 = sbr.rel (%p148) target = $region20
        $region19: #{tpu_custom_call.1} parent=11 // pred_region
          %152 = vsyncadd [#allocation7], 0
          %s154 = sshll.u32 %s2, 4
          %s155 = int_to_ptr.hbm [resolvable:$true] %s154
          %s156 = sshll.u32 [#allocation8], 4
          %s157 = int_to_ptr.vmem [resolvable:$true] %s156
          %159 = dma.hbm_to_vmem [thread:$0]  %s155, 64, %s157, [#allocation7]
        $region20: #{tpu_custom_call.1} parent=11 // pred_fallthru
          _
      $region12: #{tpu_custom_call.1} parent=5 // pred_fallthru
        _
      %p160 = scmp.lt.s32.totalorder %s13, 2
      // Predicated region
      $region21: #{tpu_custom_call.1} parent=5 // pred_check
        %p161 = pneg %p160
      $region22: #{tpu_custom_call.1} parent=5 // pred_check_branch
        %163 = sbr.rel (%p161) target = $region24
      $region23: #{tpu_custom_call.1} parent=5 // pred_region
        // Predicated region
        $region25: #{tpu_custom_call.1} parent=23 // pred_check
          %p164 = pneg %p47
        $region26: #{tpu_custom_call.1} parent=23 // pred_check_branch
          %166 = sbr.rel (%p164) target = $region28
        $region27: #{tpu_custom_call.1} parent=23 // pred_region
          %s167 = sand.u32 %s37, 1
          %s168 = scalar_lea.sflag [#allocation5], %s167
          %s169 = sand.u32 %s37, 1
          %s170 = smul.addr %s169, 16
          %s171 = scalar_lea.vmem [#allocation4], %s170
          %s172 = smul.u32 4, %s21
          %174 = vsyncadd %s168, 0
          %s175 = smul.addr %s20, 4
          %s176 = sadd.s32 %s172, %s175
          %s177 = smul.addr %s176, 4
          %s178 = scalar_lea.hbm %s0, %s177
          %s180 = sshll.u32 %s178, 4
          %s181 = int_to_ptr.hbm [resolvable:$true] %s180
          %s182 = sshll.u32 %s171, 4
          %s183 = int_to_ptr.vmem [resolvable:$true] %s182
          %185 = dma.hbm_to_vmem [thread:$0]  %s181, 256, %s183, %s168
        $region28: #{tpu_custom_call.1} parent=23 // pred_fallthru
          _
      $region24: #{tpu_custom_call.1} parent=5 // pred_fallthru
        _
      %p186 = scmp.le.s32.totalorder 1, %s13
      %p187 = scmp.lt.s32.totalorder %s13, 3
      %p188 = pnand %p186, %p187
      %p189 = pneg %p188
      // Predicated region
      $region29: #{tpu_custom_call.1} parent=5 // pred_check
        _
      $region30: #{tpu_custom_call.1} parent=5 // pred_check_branch
        %191 = sbr.rel (%p188) target = $region32
      $region31: #{tpu_custom_call.1} parent=5 // pred_region
        %s192 = ssub.s32 %s13, 1
        %s193 = sand.u32 %s40, 1
        %s194 = scalar_lea.sflag [#allocation5], %s193
        %s195 = sand.u32 %s40, 1
        %s196 = smul.addr %s195, 16
        %s197 = scalar_lea.vmem [#allocation4], %s196
        // Predicated region
        $region33: #{tpu_custom_call.1} parent=31 // pred_check
          %p198 = pneg %p53
        $region34: #{tpu_custom_call.1} parent=31 // pred_check_branch
          %200 = sbr.rel (%p198) target = $region36
        $region35: #{tpu_custom_call.1} parent=31 // pred_region
          %202 = dma.done %s194, 256
        $region36: #{tpu_custom_call.1} parent=31 // pred_fallthru
          _
        // Predicated region
        $region37: #{tpu_custom_call.1} parent=31 // pred_check
          %p203 = pneg %p74
        $region38: #{tpu_custom_call.1} parent=31 // pred_check_branch
          %205 = sbr.rel (%p203) target = $region40
        $region39: #{tpu_custom_call.1} parent=31 // pred_region
          %207 = dma.done [#allocation7], 64
        $region40: #{tpu_custom_call.1} parent=31 // pred_fallthru
          _
        // Predicated region
        $region41: #{tpu_custom_call.1} parent=31 // pred_check
          %p208 = pneg %p95
        $region42: #{tpu_custom_call.1} parent=31 // pred_check_branch
          %210 = sbr.rel (%p208) target = $region44
        $region43: #{tpu_custom_call.1} parent=31 // pred_region
          %212 = dma.done [#allocation7], 64
        $region44: #{tpu_custom_call.1} parent=31 // pred_fallthru
          _
        %s213 = sand.u32 %s40, 1
        %s214 = scalar_lea.sflag [#allocation5], %s213
        %s215 = sand.u32 %s40, 1
        %s216 = smul.addr %s215, 16
        %s217 = scalar_lea.vmem [#allocation4], %s216
        %p218 = pneg %p53
        %p219 = pneg %p50
        %p220 = pneg %p74
        %p221 = pneg %p71
        %p222 = pneg %p95
        %p223 = pneg %p92
        %p224 = pneg %p121
        %p225 = pneg %p118
        %p226 = scmp.lt.s32.totalorder %s22, 1
        %s227 = scalar_select %p226, %s22, 1
        %s228 = smul.addr %s227, 4
        %s229 = scalar_lea.vmem %s3, %s228
        %s230 = smul.u32 4, %s23
        %p231 = scmp.lt.s32.totalorder %s22, 1
        %s232 = scalar_select %p231, %s22, 1
        %s233 = smul.addr %s232, 4
        %s234 = scalar_lea.vmem %s3, %s233
        %p235 = scmp.eq.s32.totalorder %s23, 0
        // Predicated region
        $region45: #{tpu_custom_call.1} parent=31 // pred_check
          %p236 = pneg %p235
        $region46: #{tpu_custom_call.1} parent=31 // pred_check_branch
          %238 = sbr.rel (%p236) target = $region48
        $region47: #{tpu_custom_call.1} parent=31 // pred_region
          %239 = vst [vmem:[#allocation2] sm:$0xff] 0.0
          %240 = vst [vmem:[#allocation2 + $0x8] sm:$0xff] 0.0
          %241 = vst [vmem:[#allocation3] sm:$0xff] -inf
          %242 = vst [vmem:[#allocation3 + $0x8] sm:$0xff] -inf
        $region48: #{tpu_custom_call.1} parent=31 // pred_fallthru
          _
        %v243 = vld [vmem:[%s197] sm:$0xff]
        %v244 = vld [vmem:[%s197 + $0x8] sm:$0xff]
        %v245 = vld [vmem:[#allocation2] sm:$0xff]
        %v246 = vld [vmem:[#allocation2 + $0x8] sm:$0xff]
        %v247 = vadd.f32 %v245, %v243
        %v248 = vadd.f32 %v246, %v244
        %249 = vst [vmem:[#allocation2] sm:$0xff] %v247
        %250 = vst [vmem:[#allocation2 + $0x8] sm:$0xff] %v248
        %v251 = vld [vmem:[#allocation3] sm:$0xff]
        %v252 = vld [vmem:[#allocation3 + $0x8] sm:$0xff]
        %v253 = vmax.f32 %v251, %v243
        %v254 = vmax.f32 %v252, %v244
        %255 = vst [vmem:[#allocation3] sm:$0xff] %v253
        %256 = vst [vmem:[#allocation3 + $0x8] sm:$0xff] %v254
        // Predicated region
        $region49: #{tpu_custom_call.1} parent=31 // pred_check
          %p257 = pneg %p235
        $region50: #{tpu_custom_call.1} parent=31 // pred_check_branch
          %259 = sbr.rel (%p257) target = $region52
        $region51: #{tpu_custom_call.1} parent=31 // pred_region
          %v260 = vld [vmem:[#allocation2] sm:$0xff]
          %v261 = vld [vmem:[#allocation2 + $0x8] sm:$0xff]
          %264 = vst [vmem:[#allocation1] ss:$2 sm:$0xff] %v260
          %s265 = scalar_lea.vmem [#allocation1], 16
          %266 = vst [vmem:[%s265] ss:$2 sm:$0xff] %v261
          %v267 = vld.sshfl [vmem:[#allocation1] sm:$0xff pattern:$0x75316420]
          %v268 = vld.sshfl [vmem:[#allocation1 + $0x8] sm:$0xff pattern:$0x75316420]
          %v269 = vld.sshfl [vmem:[#allocation1 + $0x10] sm:$0xff pattern:$0x75316420]
          %v270 = vld.sshfl [vmem:[#allocation1 + $0x18] sm:$0xff pattern:$0x75316420]
          %vm275 = vcmask 1043456
          %v276 = vsel %vm275, %v267, 0.0
          %v277 = vsel %vm275, %v268, 0.0
          %v278 = vadd.f32 %v276, %v277
          %v279 = vsel %vm275, %v269, 0.0
          %v280 = vadd.f32 %v278, %v279
          %v281 = vsel %vm275, %v270, 0.0
          %v282 = vadd.f32 %v280, %v281
          %283 = vadd.xlane.f32.xlu0 %v282
          %v284 = vpop.xlane.xlu0 %283
          %v285 = vmul.f32 %v284, 0.001953125
          %v286 = vld [vmem:[#allocation3] sm:$0xff]
          %v287 = vld [vmem:[#allocation3 + $0x8] sm:$0xff]
          %290 = vst [vmem:[#allocation1] ss:$2 sm:$0xff] %v286
          %s291 = scalar_lea.vmem [#allocation1], 16
          %292 = vst [vmem:[%s291] ss:$2 sm:$0xff] %v287
          %v293 = vld.sshfl [vmem:[#allocation1] sm:$0xff pattern:$0x75316420]
          %v294 = vld.sshfl [vmem:[#allocation1 + $0x8] sm:$0xff pattern:$0x75316420]
          %v295 = vld.sshfl [vmem:[#allocation1 + $0x10] sm:$0xff pattern:$0x75316420]
          %v296 = vld.sshfl [vmem:[#allocation1 + $0x18] sm:$0xff pattern:$0x75316420]
          %v301 = vsel %vm275, %v293, -inf
          %v302 = vsel %vm275, %v294, -inf
          %v303 = vsel %vm275, %v295, -inf
          %v304 = vsel %vm275, %v296, -inf
          %v305 = vmax.f32 %v301, %v302
          %v306 = vmax.f32 %v303, %v304
          %v307 = vmax.f32 %v305, %v306
          %308 = vmax.xlane.f32.xlu0 %v307
          %v309 = vpop.xlane.xlu0 %308
          %vm310 = vcmask 7168
          %v311 = vsel %vm310, %v285, %v309
          %v312 = vld [vmem:[#allocation6] sm:$0xf]
          %vm313 = vcmask 31744
          %v315 = vsel %vm313, %v312, 0
          %v318 = vsel %vm275, %v311, 0
          %320 = vmatpush.msra.mxu0 0.0
          %321 = vmatpush.msra.mxu0 0.0
          %322 = vmatpush.msra.mxu0 0.0
          %323 = vmatpush.msra.mxu0 0.0
          %324 = vmatpush.msra.mxu0 0.0
          %325 = vmatpush.msra.mxu0 0.0
          %326 = vmatpush.msra.mxu0 0.0
          %327 = vmatpush.msra.mxu0 0.0
          %328 = vmatpush.msra.mxu0 0.0
          %329 = vmatpush.msra.mxu0 0.0
          %330 = vmatpush.msra.mxu0 0.0
          %331 = vmatpush.msra.mxu0 0.0
          %332 = vmatpush.msra.mxu0 0.0
          %333 = vmatpush.msra.mxu0 0.0
          %334 = vmatpush.msra.mxu0 0.0
          %335 = vmatpush.msra.mxu0 %v318
          %336 = vmatmul.f32.gmra.mxu0 %v315
          %v337 = vpop.f32.mrf.mxu0
          %v338 = vadd.f32 0.0, %v337
          %339 = vdwg.mxu0
          %v340 = vmax.f32 %v338, 0.0
          %v341 = vld [vmem:[#allocation8] sm:$0xf]
          %v343 = vsel %vm313, %v341, 0
          %v346 = vsel %vm275, %v340, 0
          %348 = vmatpush.msra.mxu0 0.0
          %349 = vmatpush.msra.mxu0 0.0
          %350 = vmatpush.msra.mxu0 0.0
          %351 = vmatpush.msra.mxu0 0.0
          %352 = vmatpush.msra.mxu0 0.0
          %353 = vmatpush.msra.mxu0 0.0
          %354 = vmatpush.msra.mxu0 0.0
          %355 = vmatpush.msra.mxu0 0.0
          %356 = vmatpush.msra.mxu0 0.0
          %357 = vmatpush.msra.mxu0 0.0
          %358 = vmatpush.msra.mxu0 0.0
          %359 = vmatpush.msra.mxu0 0.0
          %360 = vmatpush.msra.mxu0 0.0
          %361 = vmatpush.msra.mxu0 0.0
          %362 = vmatpush.msra.mxu0 0.0
          %363 = vmatpush.msra.mxu0 %v346
          %364 = vmatmul.f32.gmra.mxu0 %v343
          %v365 = vpop.f32.mrf.mxu0
          %v366 = vadd.f32 0.0, %v365
          %367 = vdwg.mxu0
          %369 = vrot.lane.b32.xlu0 %v366, 127
          %v370 = vpop.permute.xlu0 %369
          %v372 = vadd.f32 %v366, %v370
          %v373 = vxor.u32 %v372, 2147483648
          %v374 = vmul.f32 %v373, 1.442695
          %v375 = vpow.pop %v374
          %v376 = vadd.f32 %v375, 1.0
          %v377 = vrcp.pop %v376
          %v378 = vmul.f32 %v376, %v377
          %v379 = vsub.f32 1.0, %v378
          %v380 = vmul.f32 %v377, %v379
          %v381 = vadd.f32 %v377, %v380
          %vm382 = vweird.f32 %v376
          %vm383 = vweird.f32 %v377
          %vm384 = vmor %vm382, %vm383
          %v385 = vsel %vm384, %v377, %v381
          %v386 = vand.u32 2147483647, %v376
          %vm387 = vcmp.eq.f32.partialorder %v386, 8.507059e+37
          %v388 = vand.u32 %v376, 2147483648
          %v389 = vor.u32 1.1754944e-38, %v388
          %v390 = vsel %vm387, %v389, %v385
          %v391 = vmul.f32 1.0, %v390
          %vm392 = vcmask 3072
          %393 = vst.msk [vmem:[%s234] sm:$0xf] %vm392, %v391
        $region52: #{tpu_custom_call.1} parent=31 // pred_fallthru
          _
        %p394 = scmp.lt.s32.totalorder %s22, 1
        %s395 = scalar_select %p394, %s22, 1
        %s396 = smul.addr %s395, 4
        %s397 = scalar_lea.vmem %s3, %s396
        // Predicated region
        $region53: #{tpu_custom_call.1} parent=31 // pred_check
          %p398 = pneg %p118
        $region54: #{tpu_custom_call.1} parent=31 // pred_check_branch
          %400 = sbr.rel (%p398) target = $region56
        $region55: #{tpu_custom_call.1} parent=31 // pred_region
          _
        $region56: #{tpu_custom_call.1} parent=31 // pred_fallthru
          _
      $region32: #{tpu_custom_call.1} parent=5 // pred_fallthru
        _
      %p401 = scmp.le.s32.totalorder 2, %s13
      // Predicated region
      $region57: #{tpu_custom_call.1} parent=5 // pred_check
        %p402 = pneg %p401
      $region58: #{tpu_custom_call.1} parent=5 // pred_check_branch
        %404 = sbr.rel (%p402) target = $region60
      $region59: #{tpu_custom_call.1} parent=5 // pred_region
        %s405 = ssub.s32 %s13, 2
        // Predicated region
        $region61: #{tpu_custom_call.1} parent=59 // pred_check
          %p406 = pneg %p124
        $region62: #{tpu_custom_call.1} parent=59 // pred_check_branch
          %408 = sbr.rel (%p406) target = $region64
        $region63: #{tpu_custom_call.1} parent=59 // pred_region
          %p409 = scmp.lt.s32.totalorder %s24, 1
          %s410 = scalar_select %p409, %s24, 1
          %s411 = smul.addr %s410, 4
          %s412 = scalar_lea.vmem %s3, %s411
        $region64: #{tpu_custom_call.1} parent=59 // pred_fallthru
          _
      $region60: #{tpu_custom_call.1} parent=5 // pred_fallthru
        _
    $region6: #{tpu_custom_call.1} parent=1 // loop_footer
      %s17 = sadd.s32 1, %s13
    $region7: #{tpu_custom_call.1} parent=1 // loop_footer_branch
      %12 = sbr.rel target = $region3
    $region8: #{tpu_custom_call.1} parent=1 // loop_exit
      _
    %413 = vsyncpa [#allocation5], 1
    %s414 = scalar_lea.sflag [#allocation5], 1
    %415 = vsyncpa %s414, 1
    %416 = vsyncpa [#allocation7], 1

</llo_original>
